<compile_context>
chip_gen: v7x
topology: tpu7x:2x2x1
jax: 0.10.0
libtpu: 0.0.40
codegen_flags: <defaults>
</compile_context>

<pallas_src>
import jax
import jax.numpy as jnp
from jax import lax
from jax.experimental import pallas as pl
from jax.experimental.pallas import tpu as pltpu

_LANES = 128
_MIN_SPLIT_ROWS = 512  # only force >=2 grid steps when each half has >=512 rows


def _cdiv(a: int, b: int) -> int:
    return -(-a // b)


def _round_up8(n: int) -> int:
    return ((n + 7) // 8) * 8


def _pick_target_block_rows() -> int:
    """Per-generation block size (trace-time, zero runtime cost)."""
    try:
        kind = jax.devices()[0].device_kind.lower()
    except Exception:  # pragma: no cover - conservative fallback
        return 2048
    if "v6" in kind or "v7" in kind or "7x" in kind:
        return 4096  # 16 MiB pipeline footprint, fits 32 MiB scoped VMEM
    return 2048      # 8 MiB footprint, safe under v5e's 16 MiB default


def _modrelu_kernel(bias_ref, xr_ref, xi_ref, yr_ref, yi_ref):
    # bias_ref lives in SMEM, shape (1,)
    b = bias_ref[0]
    xr = xr_ref[...]
    xi = xi_ref[...]
    # relu(|x| + b) * x / |x|  ==  x * max(1 + b / |x|, 0)   for |x| > 0
    inv_mag = lax.rsqrt(xr * xr + xi * xi)          # single EUP op
    scale = jnp.maximum(jnp.float32(1.0) + b * inv_mag, jnp.float32(0.0))
    yr_ref[...] = xr * scale
    yi_ref[...] = xi * scale


def modrelu_planes(xr: jax.Array, xi: jax.Array, bias: jax.Array):
    """SoA entry point: real/imag float32 planes in, planes out (same shape)."""
    orig_shape = xr.shape
    xr = xr.astype(jnp.float32).reshape(-1)
    xi = xi.astype(jnp.float32).reshape(-1)
    total = xr.size

    # Lane-dense (rows, 128) slab.  Pad only to a lane multiple (<=127 elems),
    # and only when actually needed; NO block-multiple padding copy.
    rows = _cdiv(total, _LANES)
    lane_padded = rows * _LANES
    if lane_padded != total:
        pad = lane_padded - total
        # pad with ones (nonzero magnitude) -> no spurious NaNs in padding
        xr = jnp.concatenate([xr, jnp.ones((pad,), jnp.float32)])
        xi = jnp.concatenate([xi, jnp.ones((pad,), jnp.float32)])
    xr2 = xr.reshape(rows, _LANES)
    xi2 = xi.reshape(rows, _LANES)

    target = _pick_target_block_rows()
    if rows <= 2 * _MIN_SPLIT_ROWS:
        # Small input: single full-extent block (exempt from the 8-row rule).
        block_rows = rows
    else:
        # Mid/large: at least 2 grid steps (v7x dual-TC), blocks a multiple of
        # 8 sublanes, capped at the per-generation target; last block ragged.
        block_rows = min(target, _round_up8(_cdiv(rows, 2)))
    grid = (_cdiv(rows, block_rows),)

    tile_spec = pl.BlockSpec((block_rows, _LANES), lambda i: (i, 0))
    n = rows * _LANES
    yr2, yi2 = pl.pallas_call(
        _modrelu_kernel,
        out_shape=(
            jax.ShapeDtypeStruct((rows, _LANES), jnp.float32),
            jax.ShapeDtypeStruct((rows, _LANES), jnp.float32),
        ),
        grid=grid,
        in_specs=[
            pl.BlockSpec(memory_space=pltpu.MemorySpace.SMEM),  # bias scalar
            tile_spec,
            tile_spec,
        ],
        out_specs=(tile_spec, tile_spec),
        compiler_params=pltpu.CompilerParams(
            dimension_semantics=("parallel",),
        ),
        cost_estimate=pl.CostEstimate(
            flops=8 * n, transcendentals=n, bytes_accessed=16 * n,
        ),
    )(bias.reshape(-1).astype(jnp.float32), xr2, xi2)

    yr = yr2.reshape(-1)[:total].reshape(orig_shape)
    yi = yi2.reshape(-1)[:total].reshape(orig_shape)
    return yr, yi


def modrelu(x: jax.Array, bias: jax.Array) -> jax.Array:
    """Complex entry point matching the PyTorch module forward.

    x: complex64 array of any shape. bias: float32 array of shape (1,).
    """
    yr, yi = modrelu_planes(jnp.real(x), jnp.imag(x), bias)
    return lax.complex(yr, yi).astype(jnp.complex64)


if __name__ == "__main__":
    key = jax.random.PRNGKey(0)
    kr, ki, kb = jax.random.split(key, 3)

    # Shapes consistent with the module: complex activation tensor + bias(1)
    B, C, H, W = 2, 4, 16, 16
    xr = jax.random.normal(kr, (B, C, H, W), dtype=jnp.float32)
    xi = jax.random.normal(ki, (B, C, H, W), dtype=jnp.float32)
    x = lax.complex(xr, xi)  # complex64

    # deterministic init matching torch.rand(1) * 0.25  (uniform in [0, 0.25))
    bias = jax.random.uniform(kb, (1,), dtype=jnp.float32) * 0.25

    modrelu_jit = jax.jit(modrelu)
    out = jax.block_until_ready(modrelu_jit(x, bias))

    # reference check in plain JAX
    mag = jnp.abs(x)
    ref = jax.nn.relu(mag + bias[0]) * x / mag
    assert out.shape == x.shape and out.dtype == jnp.complex64
    assert jnp.allclose(out, ref, atol=1e-5, rtol=1e-5)

    # also exercise the lane-pad / non-128-aligned path (small odd shape)
    kr2, ki2 = jax.random.split(kr)
    x2r = jax.random.normal(kr2, (3, 37, 5), dtype=jnp.float32)
    x2i = jax.random.normal(ki2, (3, 37, 5), dtype=jnp.float32)
    x2 = lax.complex(x2r, x2i)
    out2 = jax.block_until_ready(jax.jit(modrelu)(x2, bias))
    mag2 = jnp.abs(x2)
    ref2 = jax.nn.relu(mag2 + bias[0]) * x2 / mag2
    assert jnp.allclose(out2, ref2, atol=1e-5, rtol=1e-5)

    print("KERNEL_OK")
</pallas_src>

<mosaic_0001>
module attributes {stable_mosaic.version = 11 : i64} {
  func.func @_modrelu_kernel(%arg0: i32, %arg1: memref<1xf32, #tpu.memory_space<smem>>, %arg2: memref<16x128xf32, #tpu.memory_space<vmem>>, %arg3: memref<16x128xf32, #tpu.memory_space<vmem>>, %arg4: memref<16x128xf32, #tpu.memory_space<vmem>>, %arg5: memref<16x128xf32, #tpu.memory_space<vmem>>) attributes {dimension_semantics = [#tpu.dimension_semantics<parallel>], iteration_bounds = array<i64: 1>, scalar_prefetch = 0 : i64, scratch_operands = 0 : i64, tpu.core_type = #tpu.core_type<tc>, window_params = [{transform_indices = @transform_0, window_bounds = array<i64: 1>}, {transform_indices = @transform_1, window_bounds = array<i64: 16, 128>}, {transform_indices = @transform_2, window_bounds = array<i64: 16, 128>}, {transform_indices = @transform_3, window_bounds = array<i64: 16, 128>}, {transform_indices = @transform_4, window_bounds = array<i64: 16, 128>}]} {
    %c0 = arith.constant 0 : index
    %0 = memref.load %arg1[%c0] : memref<1xf32, #tpu.memory_space<smem>>
    %c0_0 = arith.constant 0 : index
    %c0_1 = arith.constant 0 : index
    %1 = vector.load %arg2[%c0_0, %c0_1] : memref<16x128xf32, #tpu.memory_space<vmem>>, vector<16x128xf32>
    %c0_2 = arith.constant 0 : index
    %c0_3 = arith.constant 0 : index
    %2 = vector.load %arg3[%c0_2, %c0_3] : memref<16x128xf32, #tpu.memory_space<vmem>>, vector<16x128xf32>
    %3 = arith.mulf %1, %1 : vector<16x128xf32>
    %4 = arith.mulf %2, %2 : vector<16x128xf32>
    %5 = arith.addf %3, %4 : vector<16x128xf32>
    %6 = math.rsqrt %5 : vector<16x128xf32>
    %7 = vector.broadcast %0 : f32 to vector<16x128xf32>
    %8 = arith.mulf %7, %6 : vector<16x128xf32>
    %cst = arith.constant 1.000000e+00 : f32
    %9 = vector.broadcast %cst : f32 to vector<16x128xf32>
    %10 = arith.addf %9, %8 : vector<16x128xf32>
    %cst_4 = arith.constant 0.000000e+00 : f32
    %11 = vector.broadcast %cst_4 : f32 to vector<16x128xf32>
    %12 = arith.maximumf %10, %11 : vector<16x128xf32>
    %13 = arith.mulf %1, %12 : vector<16x128xf32>
    %c0_5 = arith.constant 0 : index
    %c0_6 = arith.constant 0 : index
    %14 = vector.load %arg4[%c0_5, %c0_6] : memref<16x128xf32, #tpu.memory_space<vmem>>, vector<16x128xf32>
    tpu.vector_store %arg4[%c0_5, %c0_6], %13 {strides = array<i32>} : memref<16x128xf32, #tpu.memory_space<vmem>>, vector<16x128xf32>,
    %15 = arith.mulf %2, %12 : vector<16x128xf32>
    %c0_7 = arith.constant 0 : index
    %c0_8 = arith.constant 0 : index
    %16 = vector.load %arg5[%c0_7, %c0_8] : memref<16x128xf32, #tpu.memory_space<vmem>>, vector<16x128xf32>
    tpu.vector_store %arg5[%c0_7, %c0_8], %15 {strides = array<i32>} : memref<16x128xf32, #tpu.memory_space<vmem>>, vector<16x128xf32>,
    return
  }
  func.func @transform_0(%arg0: i32) -> i32 {
    %c0_i32 = arith.constant 0 : i32
    %c0_i32_0 = arith.constant 0 : i32
    return %c0_i32 : i32
  }
  func.func @transform_1(%arg0: i32) -> (i32, i32) {
    %c0_i32 = arith.constant 0 : i32
    %c0_i32_0 = arith.constant 0 : i32
    return %arg0, %c0_i32 : i32, i32
  }
  func.func @transform_2(%arg0: i32) -> (i32, i32) {
    %c0_i32 = arith.constant 0 : i32
    %c0_i32_0 = arith.constant 0 : i32
    return %arg0, %c0_i32 : i32, i32
  }
  func.func @transform_3(%arg0: i32) -> (i32, i32) {
    %c0_i32 = arith.constant 0 : i32
    %c0_i32_0 = arith.constant 0 : i32
    return %arg0, %c0_i32 : i32, i32
  }
  func.func @transform_4(%arg0: i32) -> (i32, i32) {
    %c0_i32 = arith.constant 0 : i32
    %c0_i32_0 = arith.constant 0 : i32
    return %arg0, %c0_i32 : i32, i32
  }
}

</mosaic_0001>

<llo_original>
// kernel: custom-call
$region0: #{custom-call}
  %s0 = inlined_call_operand.hbm [shape: c64[2,4,16,16], index: 0, kind: input, shape index: {}]
  %s1 = inlined_call_operand.vmem [shape: f32[2,4,16,16], index: 1, kind: output, shape index: {}]
  $region1: #{custom-call} parent=0
    #allocation0 [shape = 's32[1]{0}', space=sflag, size = 0x4, scoped, tag = 'scoped memory for custom-call']
    %2 = vsyncpa [#allocation0], 0
    %s3 = sshll.u32 %s1, 4
    %s4 = int_to_ptr.vmem [resolvable:$true] %s3
    %6 = dma.hbm_to_vmem [thread:$0]  %s0, 2048, %s4, [#allocation0]
    %7 = dma.done [#allocation0], 2048
    %8 = vsyncpa [#allocation0], 1

// kernel: custom-call.1
$region0: #{custom-call.1}
  %s0 = inlined_call_operand.hbm [shape: c64[2,4,16,16], index: 0, kind: input, shape index: {}]
  %s1 = inlined_call_operand.vmem [shape: f32[2,4,16,16], index: 1, kind: output, shape index: {}]
  %s2 = scalar_lea.hbm %s0, 2048
  $region1: #{custom-call.1} parent=0
    #allocation0 [shape = 's32[1]{0}', space=sflag, size = 0x4, scoped, tag = 'scoped memory for custom-call.1']
    %3 = vsyncpa [#allocation0], 0
    %s4 = sshll.u32 %s1, 4
    %s5 = int_to_ptr.vmem [resolvable:$true] %s4
    %7 = dma.hbm_to_vmem [thread:$0]  %s2, 2048, %s5, [#allocation0]
    %8 = dma.done [#allocation0], 2048
    %9 = vsyncpa [#allocation0], 1

// kernel: custom-call.2
$region0: #{custom-call.2}
  %s0 = inlined_call_operand.vmem [shape: f32[2,4,16,16], index: 0, kind: input, shape index: {}]
  %s1 = inlined_call_operand.vmem [shape: f32[2,4,16,16], index: 1, kind: input, shape index: {}]
  %s2 = inlined_call_operand.hbm [shape: c64[2,4,16,16], index: 2, kind: output, shape index: {}]
  %s3 = scalar_lea.hbm %s2, 2048
  $region1: #{custom-call.2} parent=0
    #allocation0 [shape = 's32[1]{0}', space=sflag, size = 0x4, scoped, tag = 'scoped memory for custom-call.2']
    %4 = vsyncpa [#allocation0], 0
    %s5 = sshll.u32 %s0, 4
    %s6 = int_to_ptr.vmem [resolvable:$true] %s5
    %8 = dma.vmem_to_hbm [thread:$0]  %s6, 2048, %s2, [#allocation0]
    %9 = dma.done [#allocation0], 2048
    %10 = vsyncpa [#allocation0], 1
  $region2: #{custom-call.2} parent=0
    #allocation1 [shape = 's32[1]{0}', space=sflag, size = 0x4, scoped, tag = 'scoped memory for custom-call.2']
    %11 = vsyncpa [#allocation1], 0
    %s12 = sshll.u32 %s1, 4
    %s13 = int_to_ptr.vmem [resolvable:$true] %s12
    %15 = dma.vmem_to_hbm [thread:$0]  %s13, 2048, %s3, [#allocation1]
    %16 = dma.done [#allocation1], 2048
    %17 = vsyncpa [#allocation1], 1

// kernel: modrelu.1
$region0: #{modrelu.1}
  #allocation0 [shape = 'u32[]', space=smem, size = 0x4, offset = 0x4, fixed_abs, tag = 'smem constant byte address 0x4 - core index']
  #allocation1 [shape = 'u32[144,128]{1,0:T(1,128)}', space=vmem, size = 0x12000, scoped, tag = 'internal scratch']
  #allocation2 [shape = 'f32[1]{0:T(128)S(6)}', space=smem, size = 0x200, scoped, tag = 'scoped memory for modrelu.1']
  %s0 = inlined_call_operand.<no memory space> [shape: f32[1], index: 0, kind: input, shape index: {}]
  %s1 = inlined_call_operand.vmem [shape: f32[16,128], index: 1, kind: input, shape index: {}]
  %s2 = inlined_call_operand.vmem [shape: f32[16,128], index: 2, kind: input, shape index: {}]
  %s3 = inlined_call_operand.vmem [shape: f32[16,128], index: 3, kind: output, shape index: {0}]
  %s4 = inlined_call_operand.vmem [shape: f32[16,128], index: 4, kind: output, shape index: {1}]
  %5 = xla_tuple %s3, %s4
  %s6 = sld [smem:[#allocation0]]
  $region30: #{modrelu.1} parent=0
    _
  %s8 = ssub.s32 1, %s6
  %s9 = scalar_select 0, %s8, %s6
  %10 = sst [smem:[#allocation2]] %s0
  // Predicated region
  $region2: #{modrelu.1} parent=0 // pred_check
    _
  $region3: #{modrelu.1} parent=0 // pred_check_branch
    %12 = sbr.rel (0) target = $region5
  $region4: #{modrelu.1} parent=0 // pred_region
    _
  $region5: #{modrelu.1} parent=0 // pred_fallthru
    _
  // Predicated region
  $region6: #{modrelu.1} parent=0 // pred_check
    _
  $region7: #{modrelu.1} parent=0 // pred_check_branch
    %14 = sbr.rel (0) target = $region9
  $region8: #{modrelu.1} parent=0 // pred_region
    _
  $region9: #{modrelu.1} parent=0 // pred_fallthru
    _
  // Predicated region
  $region10: #{modrelu.1} parent=0 // pred_check
    _
  $region11: #{modrelu.1} parent=0 // pred_check_branch
    %16 = sbr.rel (0) target = $region13
  $region12: #{modrelu.1} parent=0 // pred_region
    _
  $region13: #{modrelu.1} parent=0 // pred_fallthru
    _
  %s17 = sld [smem:[#allocation2]]
  %v18 = vld [vmem:[%s1] sm:$0xff]
  %v19 = vld [vmem:[%s1 + $0x8] sm:$0xff]
  %v20 = vld [vmem:[%s2] sm:$0xff]
  %v21 = vld [vmem:[%s2 + $0x8] sm:$0xff]
  %v22 = vmul.f32 %v18, %v18
  %v23 = vmul.f32 %v19, %v19
  %v24 = vmul.f32 %v20, %v20
  %v25 = vmul.f32 %v21, %v21
  %v26 = vadd.f32 %v22, %v24
  %v27 = vadd.f32 %v23, %v25
  %v28 = vrsqrt.pop %v26
  %v29 = vrsqrt.pop %v27
  %v30 = vstv %s17
  %v31 = vmul.f32 %v30, %v28
  %v32 = vmul.f32 %v30, %v29
  %v33 = vadd.f32 %v31, 1.0
  %v34 = vadd.f32 %v32, 1.0
  %v35 = vmax.f32 %v33, 0.0
  %v36 = vmax.f32 %v34, 0.0
  %v37 = vmul.f32 %v18, %v35
  %v38 = vmul.f32 %v19, %v36
  %39 = vst [vmem:[%s3] sm:$0xff] %v37
  %40 = vst [vmem:[%s3 + $0x8] sm:$0xff] %v38
  %v41 = vmul.f32 %v20, %v35
  %v42 = vmul.f32 %v21, %v36
  %43 = vst [vmem:[%s4] sm:$0xff] %v41
  %44 = vst [vmem:[%s4 + $0x8] sm:$0xff] %v42
  // Predicated region
  $region14: #{modrelu.1} parent=0 // pred_check
    _
  $region15: #{modrelu.1} parent=0 // pred_check_branch
    %46 = sbr.rel (0) target = $region17
  $region16: #{modrelu.1} parent=0 // pred_region
    _
  $region17: #{modrelu.1} parent=0 // pred_fallthru
    _
  // Predicated region
  $region18: #{modrelu.1} parent=0 // pred_check
    _
  $region19: #{modrelu.1} parent=0 // pred_check_branch
    %48 = sbr.rel (0) target = $region21
  $region20: #{modrelu.1} parent=0 // pred_region
    _
  $region21: #{modrelu.1} parent=0 // pred_fallthru
    _
  // Predicated region
  $region22: #{modrelu.1} parent=0 // pred_check
    _
  $region23: #{modrelu.1} parent=0 // pred_check_branch
    %50 = sbr.rel (0) target = $region25
  $region24: #{modrelu.1} parent=0 // pred_region
    _
  $region25: #{modrelu.1} parent=0 // pred_fallthru
    _
  // Predicated region
  $region26: #{modrelu.1} parent=0 // pred_check
    _
  $region27: #{modrelu.1} parent=0 // pred_check_branch
    %52 = sbr.rel (0) target = $region29
  $region28: #{modrelu.1} parent=0 // pred_region
    _
  $region29: #{modrelu.1} parent=0 // pred_fallthru
    _

</llo_original>
